<compile_context>
chip_gen: v7x
topology: tpu7x:2x2x1
jax: 0.10.0
libtpu: 0.0.40
codegen_flags: <defaults>
</compile_context>

<pallas_src>
import functools

import jax
import jax.numpy as jnp
from jax import lax
from jax.experimental import pallas as pl
from jax.experimental.pallas import tpu as pltpu

_LANES = 128
_SUBLANES = 8
_ROW_ALIGN = 32            # LCM of f32/bf16/int8 sublane tiling (8/16/32)
_MAX_BLOCK_ROWS = 4096     # (4096, 128) f32 = 2 MiB per stream per buffer
_TARGET_STEPS = 8          # keep >= ~8 grid steps so both v7x TCs get work
_VMEM_LIMIT_BYTES = 48 << 20  # buffers + elementwise temps at 4096 rows; < v7x 64 MiB


def _round_up(x, m):
    return (x + m - 1) // m * m


def _cdiv(a, b):
    return (a + b - 1) // b


def _focal_loss_kernel(logits_ref, labels_ref, partial_ref, *, l, eps,
                       n_valid, block_rows, binary_labels, needs_mask):
    x = logits_ref[...].astype(jnp.float32)
    y = labels_ref[...].astype(jnp.float32)

    probs = jax.nn.sigmoid(x)
    one_m_probs = 1.0 - probs

    if binary_labels:
        # Hard {0,1} labels: select the operand *before* the transcendental,
        # cutting pow/log count from 4 to 2 per element (EUP is the binding
        # slot once HBM is fed).  Exactly equal to the reference for y in {0,1}.
        y_pos = y >= 0.5
        pow_base = jnp.where(y_pos, one_m_probs, probs)
        log_arg = jnp.where(y_pos, probs, one_m_probs)
        if l == 0.5:
            powed = jnp.sqrt(pow_base)
        elif l == 0.0:
            powed = jnp.ones_like(pow_base)
        else:
            powed = jnp.power(pow_base, l)
        losses = -(powed * jnp.log(log_arg + eps))
    else:
        # Exact general (soft-label) reference formula.
        if l == 0.5:
            pow_p = jnp.sqrt(probs)
            pow_1mp = jnp.sqrt(one_m_probs)
        elif l == 0.0:
            pow_p = jnp.ones_like(probs)
            pow_1mp = jnp.ones_like(probs)
        else:
            pow_p = jnp.power(probs, l)
            pow_1mp = jnp.power(one_m_probs, l)
        losses = -(y * pow_1mp * jnp.log(probs + eps)
                   + (1.0 - y) * pow_p * jnp.log(one_m_probs + eps))

    def _write(vals):
        # Sublane/lane-dense (8, 128) partial per grid step (full unmasked
        # store; avoids the (1, 128) edge case of the (8, 128) tiling rule).
        partial_ref[...] = jnp.sum(
            vals.reshape(block_rows // _SUBLANES, _SUBLANES, _LANES), axis=0)

    if not needs_mask:
        # Grid covers exactly n valid elements: no mask code anywhere.
        _write(losses)
    else:
        step = pl.program_id(0)
        is_tail = step == pl.num_programs(0) - 1

        @pl.when(jnp.logical_not(is_tail))
        def _():
            _write(losses)

        @pl.when(is_tail)
        def _():
            # Ragged / padded tail block: keep the *select* form of masking
            # so garbage (possibly NaN) in out-of-bounds rows never
            # propagates into the partial sum.
            base = step * (block_rows * _LANES)
            row = lax.broadcasted_iota(jnp.int32, (block_rows, 1), 0)
            lane = lax.broadcasted_iota(jnp.int32, (1, _LANES), 1)
            gidx = base + row * _LANES + lane
            _write(jnp.where(gidx < n_valid, losses, 0.0))


def focal_loss(logits, labels, l=0.5, eps=1e-06, binary_labels=True):
    """Pallas TPU implementation of FocalLoss.forward (returns scalar f32).

    `binary_labels=True` assumes labels are hard {0,1} (the module's actual
    usage) and uses a cheaper, mathematically identical formulation.
    Set `binary_labels=False` for soft labels (exact reference formula).
    Logits/labels may be any float/int dtype (bf16/int8 labels are fine);
    they are cast to f32 inside the kernel.
    """
    logits_flat = jnp.ravel(logits)
    labels_flat = jnp.ravel(labels)
    n = logits_flat.shape[0]
    assert n < 2 ** 31, "int32 tail-mask index would overflow"

    rows = _cdiv(n, _LANES)
    block_rows = max(_ROW_ALIGN,
                     min(_MAX_BLOCK_ROWS,
                         _round_up(_cdiv(rows, _TARGET_STEPS), _ROW_ALIGN)))
    # Pad only enough to reshape to lanes (and to one block for tiny inputs);
    # the ragged last block is handled by the in-kernel mask.
    rows_padded = max(rows, block_rows)
    n_padded = rows_padded * _LANES
    if n_padded != n:
        logits_flat = jnp.pad(logits_flat, (0, n_padded - n))
        labels_flat = jnp.pad(labels_flat, (0, n_padded - n))

    logits2d = logits_flat.reshape(rows_padded, _LANES)
    labels2d = labels_flat.reshape(rows_padded, _LANES)

    num_blocks = _cdiv(rows_padded, block_rows)
    needs_mask = (num_blocks * block_rows * _LANES) != n

    kernel = functools.partial(
        _focal_loss_kernel, l=l, eps=eps, n_valid=n, block_rows=block_rows,
        binary_labels=binary_labels, needs_mask=needs_mask)

    in_spec = pl.BlockSpec((block_rows, _LANES), lambda i: (i, 0))

    partials = pl.pallas_call(
        kernel,
        out_shape=jax.ShapeDtypeStruct((num_blocks * _SUBLANES, _LANES),
                                       jnp.float32),
        grid_spec=pltpu.PrefetchScalarGridSpec(
            num_scalar_prefetch=0,
            grid=(num_blocks,),
            in_specs=[in_spec, in_spec],
            out_specs=pl.BlockSpec((_SUBLANES, _LANES), lambda i: (i, 0)),
        ),
        compiler_params=pltpu.CompilerParams(
            dimension_semantics=("parallel",),
            vmem_limit_bytes=_VMEM_LIMIT_BYTES),
    )(logits2d, labels2d)

    # Tiny final reduction + mean in the wrapper (keeps the grid axis
    # parallel so both TensorCores can be used on v7x).
    return jnp.sum(partials) / jnp.float32(n)


def focal_loss_ref(logits, labels, l=0.5, eps=1e-06):
    """Plain-JAX reference matching the PyTorch module."""
    labels = jnp.ravel(labels).astype(jnp.float32)
    probs = jax.nn.sigmoid(jnp.ravel(logits).astype(jnp.float32))
    losses = -(labels * jnp.power(1.0 - probs, l) * jnp.log(probs + eps)
               + (1.0 - labels) * jnp.power(probs, l)
               * jnp.log(1.0 - probs + eps))
    return jnp.mean(losses)


if __name__ == "__main__":
    key = jax.random.PRNGKey(0)
    k1, k2, k3, k4, k5, k6 = jax.random.split(key, 6)

    # Case 1: (32, 128) -> single block, grid covers exactly n elements, so
    # the tail-mask code is statically skipped.
    logits_a = jax.random.normal(k1, (32, 128), jnp.float32) * 2.0
    labels_a = (jax.random.uniform(k2, (32, 128)) > 0.7).astype(jnp.float32)
    loss_a = focal_loss(logits_a, labels_a)
    jax.block_until_ready(loss_a)
    ref_a = focal_loss_ref(logits_a, labels_a)
    assert jnp.allclose(loss_a, ref_a, rtol=1e-4, atol=1e-6), (loss_a, ref_a)

    # Case 2: (64, 132) -> multi-block parallel grid with a ragged last block
    # (no round-up padding), bf16 {0,1} labels fed in their native dtype.
    logits_b = jax.random.normal(k3, (64, 132), jnp.float32) * 2.0
    labels_b = (jax.random.uniform(k4, (64, 132)) > 0.5).astype(jnp.bfloat16)
    loss_b = focal_loss(logits_b, labels_b)
    jax.block_until_ready(loss_b)
    ref_b = focal_loss_ref(logits_b, labels_b.astype(jnp.float32))
    assert jnp.allclose(loss_b, ref_b, rtol=1e-4, atol=1e-6), (loss_b, ref_b)

    # Case 3: soft labels (general formula path) with a flattened size that is
    # not a multiple of 128 (exercises the minimal pad + tail mask).
    logits_c = jax.random.normal(k5, (3, 50), jnp.float32)
    labels_c = jax.random.uniform(k6, (3, 50), jnp.float32)
    loss_c = focal_loss(logits_c, labels_c, binary_labels=False)
    jax.block_until_ready(loss_c)
    ref_c = focal_loss_ref(logits_c, labels_c)
    assert jnp.allclose(loss_c, ref_c, rtol=1e-4, atol=1e-6), (loss_c, ref_c)

    print("KERNEL_OK")
</pallas_src>

<mosaic_0001>
module attributes {stable_mosaic.version = 11 : i64} {
  func.func @_focal_loss_kernel(%arg0: i32, %arg1: memref<32x128xf32, #tpu.memory_space<vmem>>, %arg2: memref<32x128xf32, #tpu.memory_space<vmem>>, %arg3: memref<8x128xf32, #tpu.memory_space<vmem>>) attributes {dimension_semantics = [#tpu.dimension_semantics<parallel>], iteration_bounds = array<i64: 1>, scalar_prefetch = 0 : i64, scratch_operands = 0 : i64, tpu.core_type = #tpu.core_type<tc>, window_params = [{transform_indices = @transform_0, window_bounds = array<i64: 32, 128>}, {transform_indices = @transform_1, window_bounds = array<i64: 32, 128>}, {transform_indices = @transform_2, window_bounds = array<i64: 8, 128>}]} {
    %c0 = arith.constant 0 : index
    %c0_0 = arith.constant 0 : index
    %0 = vector.load %arg1[%c0, %c0_0] : memref<32x128xf32, #tpu.memory_space<vmem>>, vector<32x128xf32>
    %c0_1 = arith.constant 0 : index
    %c0_2 = arith.constant 0 : index
    %1 = vector.load %arg2[%c0_1, %c0_2] : memref<32x128xf32, #tpu.memory_space<vmem>>, vector<32x128xf32>
    %2 = arith.negf %0 : vector<32x128xf32>
    %3 = math.exp %2 : vector<32x128xf32>
    %cst = arith.constant 1.000000e+00 : f32
    %4 = vector.broadcast %cst : f32 to vector<32x128xf32>
    %5 = arith.addf %4, %3 : vector<32x128xf32>
    %6 = arith.divf %4, %5 : vector<32x128xf32>
    %cst_3 = arith.constant 1.000000e+00 : f32
    %7 = vector.broadcast %cst_3 : f32 to vector<32x128xf32>
    %8 = arith.subf %7, %6 : vector<32x128xf32>
    %cst_4 = arith.constant 5.000000e-01 : f32
    %9 = vector.broadcast %cst_4 : f32 to vector<32x128xf32>
    %10 = arith.cmpf oge, %1, %9 : vector<32x128xf32>
    %11 = arith.select %10, %8, %6 : vector<32x128xi1>, vector<32x128xf32>
    %12 = arith.select %10, %6, %8 : vector<32x128xi1>, vector<32x128xf32>
    %13 = math.sqrt %11 : vector<32x128xf32>
    %cst_5 = arith.constant 9.99999997E-7 : f32
    %14 = vector.broadcast %cst_5 : f32 to vector<32x128xf32>
    %15 = arith.addf %12, %14 : vector<32x128xf32>
    %16 = math.log %15 : vector<32x128xf32>
    %17 = arith.mulf %13, %16 : vector<32x128xf32>
    %cst_6 = arith.constant 0.000000e+00 : f32
    %18 = vector.broadcast %cst_6 : f32 to vector<32x128xf32>
    %19 = arith.subf %18, %17 : vector<32x128xf32>
    %20 = vector.shape_cast %19 : vector<32x128xf32> to vector<4x8x128xf32>
    %cst_7 = arith.constant dense<0.000000e+00> : vector<8x128xf32>
    %21 = vector.multi_reduction <add>, %20, %cst_7 [0] : vector<4x8x128xf32> to vector<8x128xf32>
    %c0_8 = arith.constant 0 : index
    %c0_9 = arith.constant 0 : index
    %22 = vector.load %arg3[%c0_8, %c0_9] : memref<8x128xf32, #tpu.memory_space<vmem>>, vector<8x128xf32>
    tpu.vector_store %arg3[%c0_8, %c0_9], %21 {strides = array<i32>} : memref<8x128xf32, #tpu.memory_space<vmem>>, vector<8x128xf32>,
    return
  }
  func.func @transform_0(%arg0: i32) -> (i32, i32) {
    %c0_i32 = arith.constant 0 : i32
    %c0_i32_0 = arith.constant 0 : i32
    return %arg0, %c0_i32 : i32, i32
  }
  func.func @transform_1(%arg0: i32) -> (i32, i32) {
    %c0_i32 = arith.constant 0 : i32
    %c0_i32_0 = arith.constant 0 : i32
    return %arg0, %c0_i32 : i32, i32
  }
  func.func @transform_2(%arg0: i32) -> (i32, i32) {
    %c0_i32 = arith.constant 0 : i32
    %c0_i32_0 = arith.constant 0 : i32
    return %arg0, %c0_i32 : i32, i32
  }
}

</mosaic_0001>

<llo_original>
// kernel: tpu_custom_call.1
$region0: #{tpu_custom_call.1}
  #allocation0 [shape = 'u32[]', space=smem, size = 0x4, offset = 0x4, fixed_abs, tag = 'smem constant byte address 0x4 - core index']
  #allocation1 [shape = 'u32[144,128]{1,0:T(1,128)}', space=vmem, size = 0x12000, scoped, tag = 'internal scratch']
  %s0 = inlined_call_operand.hbm [shape: f32[32,128], index: 0, kind: input, shape index: {}]
  %s1 = inlined_call_operand.hbm [shape: f32[32,128], index: 1, kind: input, shape index: {}]
  %s2 = inlined_call_operand.hbm [shape: f32[8,128], index: 2, kind: output, shape index: {}]
  %s3 = sld [smem:[#allocation0]]
  $region26: #{tpu_custom_call.1} parent=0
    _
  %s5 = ssub.s32 1, %s3
  %s6 = scalar_select 0, %s5, %s3
  $region1: #{tpu_custom_call.1} parent=0
    #allocation2 [shape = 'u8[16384]{0}', space=vmem, size = 0x4000, scoped, tag = 'input window, operand 0, single buffered']
    #allocation3 [shape = 's32[1]{0}', space=sflag, size = 0x4, scoped, tag = 'scoped memory for tpu_custom_call.1']
    #allocation4 [shape = 's32[1]{0}', space=sflag, size = 0x4, scoped, tag = 'scoped memory for tpu_custom_call.1']
    #allocation5 [shape = 'u8[16384]{0}', space=vmem, size = 0x4000, scoped, tag = 'input window, operand 1, single buffered']
    #allocation6 [shape = 's32[1]{0}', space=sflag, size = 0x4, scoped, tag = 'scoped memory for tpu_custom_call.1']
    #allocation7 [shape = 'u8[4096]{0}', space=vmem, size = 0x1000, scoped, tag = 'output window, operand 0, single buffered']
    %7 = vsyncpa [#allocation3], 0
    %8 = vsyncpa [#allocation6], 0
    %9 = vsyncpa [#allocation4], 0
    // Predicated region
    $region2: #{tpu_custom_call.1} parent=1 // pred_check
      _
    $region3: #{tpu_custom_call.1} parent=1 // pred_check_branch
      %11 = sbr.rel (0) target = $region5
    $region4: #{tpu_custom_call.1} parent=1 // pred_region
      %s13 = ssub.s32 512, 512
      %14 = vsyncadd [#allocation3], %s13
      %s15 = sshll.u32 [#allocation2], 4
      %s16 = int_to_ptr.vmem [resolvable:$true] %s15
      %21 = dma.hbm_to_vmem [thread:$0]  %s0, 512, %s16, [#allocation3], 128, 128, 8
    $region5: #{tpu_custom_call.1} parent=1 // pred_fallthru
      _
    // Predicated region
    $region6: #{tpu_custom_call.1} parent=1 // pred_check
      _
    $region7: #{tpu_custom_call.1} parent=1 // pred_check_branch
      %23 = sbr.rel (0) target = $region9
    $region8: #{tpu_custom_call.1} parent=1 // pred_region
      %s25 = ssub.s32 512, 512
      %26 = vsyncadd [#allocation6], %s25
      %s27 = sshll.u32 [#allocation5], 4
      %s28 = int_to_ptr.vmem [resolvable:$true] %s27
      %33 = dma.hbm_to_vmem [thread:$0]  %s1, 512, %s28, [#allocation6], 128, 128, 8
    $region9: #{tpu_custom_call.1} parent=1 // pred_fallthru
      _
    // Predicated region
    $region10: #{tpu_custom_call.1} parent=1 // pred_check
      _
    $region11: #{tpu_custom_call.1} parent=1 // pred_check_branch
      %35 = sbr.rel (0) target = $region13
    $region12: #{tpu_custom_call.1} parent=1 // pred_region
      %36 = dma.done [#allocation3], 512
    $region13: #{tpu_custom_call.1} parent=1 // pred_fallthru
      _
    // Predicated region
    $region14: #{tpu_custom_call.1} parent=1 // pred_check
      _
    $region15: #{tpu_custom_call.1} parent=1 // pred_check_branch
      %38 = sbr.rel (0) target = $region17
    $region16: #{tpu_custom_call.1} parent=1 // pred_region
      %39 = dma.done [#allocation6], 512
    $region17: #{tpu_custom_call.1} parent=1 // pred_fallthru
      _
    %v40 = vld [vmem:[#allocation2] sm:$0xff]
    %v41 = vld [vmem:[#allocation2 + $0x8] sm:$0xff]
    %v42 = vld [vmem:[#allocation2 + $0x10] sm:$0xff]
    %v43 = vld [vmem:[#allocation2 + $0x18] sm:$0xff]
    %v44 = vld [vmem:[#allocation5] sm:$0xff]
    %v45 = vld [vmem:[#allocation5 + $0x8] sm:$0xff]
    %v46 = vld [vmem:[#allocation5 + $0x10] sm:$0xff]
    %v47 = vld [vmem:[#allocation5 + $0x18] sm:$0xff]
    %v48 = vxor.u32 %v40, 2147483648
    %v49 = vxor.u32 %v41, 2147483648
    %v50 = vxor.u32 %v42, 2147483648
    %v51 = vxor.u32 %v43, 2147483648
    %v52 = vmul.f32 %v48, 1.442695
    %v53 = vpow.pop %v52
    %v54 = vmul.f32 %v49, 1.442695
    %v55 = vpow.pop %v54
    %v56 = vmul.f32 %v50, 1.442695
    %v57 = vpow.pop %v56
    %v58 = vmul.f32 %v51, 1.442695
    %v59 = vpow.pop %v58
    %v60 = vadd.f32 %v53, 1.0
    %v61 = vadd.f32 %v55, 1.0
    %v62 = vadd.f32 %v57, 1.0
    %v63 = vadd.f32 %v59, 1.0
    %v64 = vrcp.pop %v60
    %v65 = vmul.f32 1.0, %v64
    %v66 = vrcp.pop %v61
    %v67 = vmul.f32 1.0, %v66
    %v68 = vrcp.pop %v62
    %v69 = vmul.f32 1.0, %v68
    %v70 = vrcp.pop %v63
    %v71 = vmul.f32 1.0, %v70
    %v72 = vsub.f32 1.0, %v65
    %v73 = vsub.f32 1.0, %v67
    %v74 = vsub.f32 1.0, %v69
    %v75 = vsub.f32 1.0, %v71
    %vm76 = vcmp.ge.f32.partialorder %v44, 0.5
    %vm77 = vcmp.ge.f32.partialorder %v45, 0.5
    %vm78 = vcmp.ge.f32.partialorder %v46, 0.5
    %vm79 = vcmp.ge.f32.partialorder %v47, 0.5
    %v80 = vsel %vm76, %v72, %v65
    %v81 = vsel %vm77, %v73, %v67
    %v82 = vsel %vm78, %v74, %v69
    %v83 = vsel %vm79, %v75, %v71
    %v84 = vsel %vm76, %v65, %v72
    %v85 = vsel %vm77, %v67, %v73
    %v86 = vsel %vm78, %v69, %v74
    %v87 = vsel %vm79, %v71, %v75
    %v88 = vrsqrt.pop %v80
    %v89 = vmul.f32 %v80, %v88
    %vm90 = vcmp.eq.f32.partialorder %v80, inf
    %v91 = vsel %vm90, %v80, %v89
    %vm92 = vcmp.eq.f32.partialorder %v80, 0.0
    %v93 = vand.u32 %v80, 2147483648
    %v94 = vsel %vm92, %v93, %v91
    %v95 = vrsqrt.pop %v81
    %v96 = vmul.f32 %v81, %v95
    %vm97 = vcmp.eq.f32.partialorder %v81, inf
    %v98 = vsel %vm97, %v81, %v96
    %vm99 = vcmp.eq.f32.partialorder %v81, 0.0
    %v100 = vand.u32 %v81, 2147483648
    %v101 = vsel %vm99, %v100, %v98
    %v102 = vrsqrt.pop %v82
    %v103 = vmul.f32 %v82, %v102
    %vm104 = vcmp.eq.f32.partialorder %v82, inf
    %v105 = vsel %vm104, %v82, %v103
    %vm106 = vcmp.eq.f32.partialorder %v82, 0.0
    %v107 = vand.u32 %v82, 2147483648
    %v108 = vsel %vm106, %v107, %v105
    %v109 = vrsqrt.pop %v83
    %v110 = vmul.f32 %v83, %v109
    %vm111 = vcmp.eq.f32.partialorder %v83, inf
    %v112 = vsel %vm111, %v83, %v110
    %vm113 = vcmp.eq.f32.partialorder %v83, 0.0
    %v114 = vand.u32 %v83, 2147483648
    %v115 = vsel %vm113, %v114, %v112
    %v116 = vadd.f32 %v84, 1e-06
    %v117 = vadd.f32 %v85, 1e-06
    %v118 = vadd.f32 %v86, 1e-06
    %v119 = vadd.f32 %v87, 1e-06
    %v120 = vlog2.pop %v116
    %v121 = vmul.f32 %v120, 0.6931472
    %v122 = vlog2.pop %v117
    %v123 = vmul.f32 %v122, 0.6931472
    %v124 = vlog2.pop %v118
    %v125 = vmul.f32 %v124, 0.6931472
    %v126 = vlog2.pop %v119
    %v127 = vmul.f32 %v126, 0.6931472
    %v128 = vmul.f32 %v94, %v121
    %v129 = vmul.f32 %v101, %v123
    %v130 = vmul.f32 %v108, %v125
    %v131 = vmul.f32 %v115, %v127
    %v132 = vsub.f32 0.0, %v128
    %v133 = vsub.f32 0.0, %v129
    %v134 = vsub.f32 0.0, %v130
    %v135 = vsub.f32 0.0, %v131
    %v136 = vadd.f32 %v132, %v133
    %v137 = vadd.f32 %v136, %v134
    %v138 = vadd.f32 %v137, %v135
    %139 = vst [vmem:[#allocation7] sm:$0xff] %v138
    // Predicated region
    $region18: #{tpu_custom_call.1} parent=1 // pred_check
      _
    $region19: #{tpu_custom_call.1} parent=1 // pred_check_branch
      %141 = sbr.rel (0) target = $region21
    $region20: #{tpu_custom_call.1} parent=1 // pred_region
      %s143 = ssub.s32 128, 128
      %144 = vsyncadd [#allocation4], %s143
      %s146 = sshll.u32 [#allocation7], 4
      %s147 = int_to_ptr.vmem [resolvable:$true] %s146
      %149 = dma.vmem_to_hbm [thread:$0]  %s147, 128, %s2, [#allocation4]
    $region21: #{tpu_custom_call.1} parent=1 // pred_fallthru
      _
    // Predicated region
    $region22: #{tpu_custom_call.1} parent=1 // pred_check
      _
    $region23: #{tpu_custom_call.1} parent=1 // pred_check_branch
      %151 = sbr.rel (0) target = $region25
    $region24: #{tpu_custom_call.1} parent=1 // pred_region
      %152 = dma.done [#allocation4], 128
    $region25: #{tpu_custom_call.1} parent=1 // pred_fallthru
      _
    %153 = vsyncpa [#allocation3], 1
    %154 = vsyncpa [#allocation6], 1
    %155 = vsyncpa [#allocation4], 1

</llo_original>
